<compile_context>
chip_gen: v5e
topology: v5e:2x2
jax: 0.10.0
libtpu: 0.0.40
codegen_flags: <defaults>
</compile_context>

<pallas_src>
import functools

import jax
import jax.numpy as jnp
from jax import lax
from jax.experimental import pallas as pl
from jax.experimental.pallas import tpu as pltpu

LANES = 128
_CHUNK_ROWS = 512  # inner-loop chunk (rows) -> ~256 KiB f32 live intermediate


def _round_up(x, m):
    return (x + m - 1) // m * m


def _bce_elem(x, t):
    # Numerically-stable BCE with logits (pos_weight=None):
    #   loss = max(x, 0) - x*t + log1p(exp(-|x|))
    return jnp.maximum(x, 0.0) - x * t + jnp.log1p(jnp.exp(-jnp.abs(x)))


def _bce_partial_kernel(x_ref, t_ref, out_ref, *, chunk, ragged,
                        valid_rows_last):
    """Per-block partial sums of BCE-with-logits reduced to an (8,128) slab."""
    tm, lanes = x_ref.shape
    n_chunks = tm // chunk

    def block_sum(masked):
        def body(c, acc):
            start = pl.multiple_of(c * chunk, chunk)
            x = x_ref[pl.ds(start, chunk), :].astype(jnp.float32)
            t = t_ref[pl.ds(start, chunk), :].astype(jnp.float32)
            loss = _bce_elem(x, t)
            if masked:
                # Row-threshold mask for the ragged last block only: rows at or
                # beyond the true row count contribute zero (unbiased mean).
                row = lax.broadcasted_iota(jnp.int32, (chunk, lanes), 0) + start
                loss = jnp.where(row < valid_rows_last, loss, 0.0)
            # Sublane-group reduce (VPU vreg adds, keeps lanes): (chunk,128)->(8,128)
            return acc + loss.reshape(chunk // 8, 8, lanes).sum(axis=0)

        return lax.fori_loop(0, n_chunks, body,
                             jnp.zeros((8, lanes), jnp.float32), unroll=True)

    if ragged:
        i = pl.program_id(0)
        last = pl.num_programs(0) - 1

        @pl.when(i != last)
        def _():
            out_ref[...] = block_sum(False)

        @pl.when(i == last)
        def _():
            out_ref[...] = block_sum(True)
    else:
        out_ref[...] = block_sum(False)


def focal_loss_forward(inputs, targets, *, alpha=1, gamma=2, block_rows=8192):
    """Returns mean BCE-with-logits, matching FocalLoss.forward's return value.

    alpha/gamma are accepted for API parity but unused: the reference module
    returns BCE_loss.mean(), not the focal-weighted loss.
    """
    del alpha, gamma  # not part of the returned value in the reference module
    assert inputs.shape == targets.shape
    total = int(inputs.size)
    if total == 0:
        # torch .mean() of an empty tensor is NaN.
        return jnp.float32(jnp.nan)

    flat_x = inputs.reshape(-1)
    flat_t = targets.reshape(-1)

    full_rows = total // LANES
    rem = total - full_rows * LANES

    # Sub-128-element tail: tiny, handled in plain JAX (no padded input copies).
    tail_sum = jnp.float32(0.0)
    if rem:
        tail_sum = jnp.sum(
            _bce_elem(flat_x[full_rows * LANES:].astype(jnp.float32),
                      flat_t[full_rows * LANES:].astype(jnp.float32)))

    if full_rows == 0:
        return tail_sum / jnp.float32(total)

    # Row tiling: tm rows x 128 lanes per grid step, aligned to the dtype's
    # native sublane packing (f32: 8, bf16: 16, int8/fp8: 32).
    itemsize = jnp.dtype(inputs.dtype).itemsize
    sublane = {4: 8, 2: 16, 1: 32}.get(itemsize, 8)
    if full_rows >= _CHUNK_ROWS:
        blocks_of_chunks = max(1, block_rows // _CHUNK_ROWS)
        needed_chunks = -(-full_rows // _CHUNK_ROWS)
        tm = min(blocks_of_chunks, needed_chunks) * _CHUNK_ROWS
        chunk = _CHUNK_ROWS
    else:
        tm = _round_up(full_rows, sublane)
        chunk = tm

    num_blocks = -(-full_rows // tm)
    valid_rows_last = full_rows - (num_blocks - 1) * tm
    ragged = valid_rows_last != tm  # last block is a Pallas partial block

    # Native-dtype lane-dense view; no padding, no wrapper f32 cast.
    x2 = flat_x[: full_rows * LANES].reshape(full_rows, LANES)
    t2 = flat_t[: full_rows * LANES].reshape(full_rows, LANES)

    kernel = functools.partial(
        _bce_partial_kernel,
        chunk=chunk,
        ragged=ragged,
        valid_rows_last=valid_rows_last,
    )

    partials = pl.pallas_call(
        kernel,
        out_shape=jax.ShapeDtypeStruct((num_blocks * 8, LANES), jnp.float32),
        grid_spec=pltpu.PrefetchScalarGridSpec(
            num_scalar_prefetch=0,
            grid=(num_blocks,),
            in_specs=[
                pl.BlockSpec((tm, LANES), lambda i: (i, 0)),
                pl.BlockSpec((tm, LANES), lambda i: (i, 0)),
            ],
            out_specs=pl.BlockSpec((8, LANES), lambda i: (i, 0)),
        ),
        compiler_params=pltpu.CompilerParams(
            # Disjoint output slabs, no carried accumulator -> parallel axis
            # (sharded across TensorCores where available, e.g. v7x megacore).
            dimension_semantics=("parallel",),
            # 16 MiB of double-buffered f32 input blocks + small intermediates;
            # explicit limit covers v5e's 16 MiB default scoped VMEM and stays
            # well under v7x's 64 MiB physical VMEM.
            vmem_limit_bytes=40 * 1024 * 1024,
        ),
    )(x2, t2)

    # Tiny final cross-lane reduce + mean in plain JAX.
    return (jnp.sum(partials) + tail_sum) / jnp.float32(total)


def _reference(inputs, targets):
    x = inputs.astype(jnp.float32)
    t = targets.astype(jnp.float32)
    return jnp.mean(_bce_elem(x, t))


if __name__ == "__main__":
    key = jax.random.PRNGKey(0)
    k1, k2 = jax.random.split(key)
    # NCHW-shaped logits and soft targets in [0, 1].
    B, C, H, W = 2, 4, 16, 16
    inputs = jax.random.normal(k1, (B, C, H, W), dtype=jnp.float32) * 2.0
    targets = jax.random.uniform(k2, (B, C, H, W), dtype=jnp.float32)

    out = jax.block_until_ready(focal_loss_forward(inputs, targets))
    ref = jax.block_until_ready(_reference(inputs, targets))
    assert jnp.allclose(out, ref, rtol=1e-5, atol=1e-5), (out, ref)
    print("KERNEL_OK")
</pallas_src>

<mosaic_0001>
module attributes {stable_mosaic.version = 11 : i64} {
  func.func @_bce_partial_kernel(%arg0: i32, %arg1: memref<16x128xf32, #tpu.memory_space<vmem>>, %arg2: memref<16x128xf32, #tpu.memory_space<vmem>>, %arg3: memref<8x128xf32, #tpu.memory_space<vmem>>) attributes {dimension_semantics = [#tpu.dimension_semantics<parallel>], iteration_bounds = array<i64: 1>, scalar_prefetch = 0 : i64, scratch_operands = 0 : i64, tpu.core_type = #tpu.core_type<tc>, window_params = [{transform_indices = @transform_0, window_bounds = array<i64: 16, 128>}, {transform_indices = @transform_1, window_bounds = array<i64: 16, 128>}, {transform_indices = @transform_2, window_bounds = array<i64: 8, 128>}]} {
    %cst = arith.constant 0.000000e+00 : f32
    %0 = vector.broadcast %cst : f32 to vector<8x128xf32>
    %c0_i32 = arith.constant 0 : i32
    %c16_i32 = arith.constant 16 : i32
    %1 = arith.muli %c0_i32, %c16_i32 : i32
    %2 = tpu.assume_multiple %1, 16 : i32
    %3 = arith.index_cast %2 : i32 to index
    %c0 = arith.constant 0 : index
    %4 = vector.load %arg1[%3, %c0] : memref<16x128xf32, #tpu.memory_space<vmem>>, vector<16x128xf32>
    %5 = arith.index_cast %2 : i32 to index
    %c0_0 = arith.constant 0 : index
    %6 = vector.load %arg2[%5, %c0_0] : memref<16x128xf32, #tpu.memory_space<vmem>>, vector<16x128xf32>
    %cst_1 = arith.constant 0.000000e+00 : f32
    %7 = vector.broadcast %cst_1 : f32 to vector<16x128xf32>
    %8 = arith.maximumf %4, %7 : vector<16x128xf32>
    %9 = arith.mulf %4, %6 : vector<16x128xf32>
    %10 = arith.subf %8, %9 : vector<16x128xf32>
    %11 = math.absf %4 : vector<16x128xf32>
    %cst_2 = arith.constant 0.000000e+00 : f32
    %12 = vector.broadcast %cst_2 : f32 to vector<16x128xf32>
    %13 = arith.subf %12, %11 : vector<16x128xf32>
    %14 = math.exp %13 : vector<16x128xf32>
    %15 = math.log1p %14 : vector<16x128xf32>
    %16 = arith.addf %10, %15 : vector<16x128xf32>
    %17 = vector.shape_cast %16 : vector<16x128xf32> to vector<2x8x128xf32>
    %cst_3 = arith.constant dense<0.000000e+00> : vector<8x128xf32>
    %18 = vector.multi_reduction <add>, %17, %cst_3 [0] : vector<2x8x128xf32> to vector<8x128xf32>
    %19 = arith.addf %0, %18 : vector<8x128xf32>
    %c1_i32 = arith.constant 1 : i32
    %c0_4 = arith.constant 0 : index
    %c0_5 = arith.constant 0 : index
    %20 = vector.load %arg3[%c0_4, %c0_5] : memref<8x128xf32, #tpu.memory_space<vmem>>, vector<8x128xf32>
    tpu.vector_store %arg3[%c0_4, %c0_5], %19 {strides = array<i32>} : memref<8x128xf32, #tpu.memory_space<vmem>>, vector<8x128xf32>,
    return
  }
  func.func @transform_0(%arg0: i32) -> (i32, i32) {
    %c0_i32 = arith.constant 0 : i32
    %c0_i32_0 = arith.constant 0 : i32
    return %arg0, %c0_i32 : i32, i32
  }
  func.func @transform_1(%arg0: i32) -> (i32, i32) {
    %c0_i32 = arith.constant 0 : i32
    %c0_i32_0 = arith.constant 0 : i32
    return %arg0, %c0_i32 : i32, i32
  }
  func.func @transform_2(%arg0: i32) -> (i32, i32) {
    %c0_i32 = arith.constant 0 : i32
    %c0_i32_0 = arith.constant 0 : i32
    return %arg0, %c0_i32 : i32, i32
  }
}

</mosaic_0001>

<llo_original>
// kernel: tpu_custom_call.1
$region0: #{tpu_custom_call.1}
  #allocation0 [shape = 'u32[]', space=smem, size = 0x4, offset = 0x4, fixed_abs, tag = 'smem constant byte address 0x4 - core index']
  #allocation1 [shape = 'u32[72,128]{1,0:T(1,128)}', space=vmem, size = 0x9000, scoped, tag = 'internal scratch']
  %s0 = inlined_call_operand.hbm [shape: f32[16,128], index: 0, kind: input, shape index: {}]
  %s1 = inlined_call_operand.hbm [shape: f32[16,128], index: 1, kind: input, shape index: {}]
  %s2 = inlined_call_operand.hbm [shape: f32[8,128], index: 2, kind: output, shape index: {}]
  %s3 = sld [smem:[#allocation0]]
  $region26: #{tpu_custom_call.1} parent=0
    _
  %s5 = ssub.s32 1, %s3
  %s6 = scalar_select 0, %s5, %s3
  $region1: #{tpu_custom_call.1} parent=0
    #allocation2 [shape = 'u8[8192]{0}', space=vmem, size = 0x2000, scoped, tag = 'input window, operand 0, single buffered']
    #allocation3 [shape = 's32[1]{0}', space=sflag, size = 0x4, scoped, tag = 'scoped memory for tpu_custom_call.1']
    #allocation4 [shape = 's32[1]{0}', space=sflag, size = 0x4, scoped, tag = 'scoped memory for tpu_custom_call.1']
    #allocation5 [shape = 'u8[8192]{0}', space=vmem, size = 0x2000, scoped, tag = 'input window, operand 1, single buffered']
    #allocation6 [shape = 's32[1]{0}', space=sflag, size = 0x4, scoped, tag = 'scoped memory for tpu_custom_call.1']
    #allocation7 [shape = 'u8[4096]{0}', space=vmem, size = 0x1000, scoped, tag = 'output window, operand 0, single buffered']
    %7 = vsyncpa [#allocation3], 0
    %8 = vsyncpa [#allocation6], 0
    %9 = vsyncpa [#allocation4], 0
    // Predicated region
    $region2: #{tpu_custom_call.1} parent=1 // pred_check
      _
    $region3: #{tpu_custom_call.1} parent=1 // pred_check_branch
      %11 = sbr.rel (0) target = $region5
    $region4: #{tpu_custom_call.1} parent=1 // pred_region
      %13 = vsyncadd [#allocation3], 0
      %s14 = sshll.u32 %s0, 4
      %s15 = int_to_ptr.hbm [resolvable:$true] %s14
      %s16 = sshll.u32 [#allocation2], 4
      %s17 = int_to_ptr.vmem [resolvable:$true] %s16
      %22 = dma.hbm_to_vmem [thread:$0]  %s15, 256, %s17, [#allocation3], 128, 128, 8
    $region5: #{tpu_custom_call.1} parent=1 // pred_fallthru
      _
    // Predicated region
    $region6: #{tpu_custom_call.1} parent=1 // pred_check
      _
    $region7: #{tpu_custom_call.1} parent=1 // pred_check_branch
      %24 = sbr.rel (0) target = $region9
    $region8: #{tpu_custom_call.1} parent=1 // pred_region
      %26 = vsyncadd [#allocation6], 0
      %s27 = sshll.u32 %s1, 4
      %s28 = int_to_ptr.hbm [resolvable:$true] %s27
      %s29 = sshll.u32 [#allocation5], 4
      %s30 = int_to_ptr.vmem [resolvable:$true] %s29
      %35 = dma.hbm_to_vmem [thread:$0]  %s28, 256, %s30, [#allocation6], 128, 128, 8
    $region9: #{tpu_custom_call.1} parent=1 // pred_fallthru
      _
    // Predicated region
    $region10: #{tpu_custom_call.1} parent=1 // pred_check
      _
    $region11: #{tpu_custom_call.1} parent=1 // pred_check_branch
      %37 = sbr.rel (0) target = $region13
    $region12: #{tpu_custom_call.1} parent=1 // pred_region
      %39 = dma.done [#allocation3], 256
    $region13: #{tpu_custom_call.1} parent=1 // pred_fallthru
      _
    // Predicated region
    $region14: #{tpu_custom_call.1} parent=1 // pred_check
      _
    $region15: #{tpu_custom_call.1} parent=1 // pred_check_branch
      %41 = sbr.rel (0) target = $region17
    $region16: #{tpu_custom_call.1} parent=1 // pred_region
      %43 = dma.done [#allocation6], 256
    $region17: #{tpu_custom_call.1} parent=1 // pred_fallthru
      _
    %v44 = vld [vmem:[#allocation2] sm:$0xff]
    %v45 = vld [vmem:[#allocation2 + $0x8] sm:$0xff]
    %v46 = vld [vmem:[#allocation5] sm:$0xff]
    %v47 = vld [vmem:[#allocation5 + $0x8] sm:$0xff]
    %v48 = vmax.f32 %v44, 0.0
    %v49 = vmax.f32 %v45, 0.0
    %v50 = vmul.f32 %v44, %v46
    %v51 = vmul.f32 %v45, %v47
    %v52 = vsub.f32 %v48, %v50
    %v53 = vsub.f32 %v49, %v51
    %v54 = vand.u32 2147483647, %v44
    %v55 = vand.u32 2147483647, %v45
    %v56 = vsub.f32 0.0, %v54
    %v57 = vsub.f32 0.0, %v55
    %v58 = vmul.f32 %v56, 1.442695
    %v59 = vpow.pop %v58
    %v60 = vmul.f32 %v57, 1.442695
    %v61 = vpow.pop %v60
    %v62 = vadd.f32 %v59, 1.0
    %v63 = vlog2.pop %v62
    %v64 = vmul.f32 %v63, 0.6931472
    %v65 = vmul.f32 -0.5, %v59
    %v66 = vadd.f32 %v65, 1.0
    %v67 = vmul.f32 %v66, %v59
    %v68 = vand.u32 2147483647, %v59
    %vm69 = vcmp.lt.f32.partialorder %v68, 0.0004427343
    %v70 = vsel %vm69, %v67, %v64
    %v71 = vadd.f32 %v61, 1.0
    %v72 = vlog2.pop %v71
    %v73 = vmul.f32 %v72, 0.6931472
    %v74 = vmul.f32 -0.5, %v61
    %v75 = vadd.f32 %v74, 1.0
    %v76 = vmul.f32 %v75, %v61
    %v77 = vand.u32 2147483647, %v61
    %vm78 = vcmp.lt.f32.partialorder %v77, 0.0004427343
    %v79 = vsel %vm78, %v76, %v73
    %v80 = vadd.f32 %v52, %v70
    %v81 = vadd.f32 %v53, %v79
    %v82 = vadd.f32 %v80, %v81
    %v83 = vadd.f32 %v82, 0.0
    %84 = vst [vmem:[#allocation7] sm:$0xff] %v83
    // Predicated region
    $region18: #{tpu_custom_call.1} parent=1 // pred_check
      _
    $region19: #{tpu_custom_call.1} parent=1 // pred_check_branch
      %86 = sbr.rel (0) target = $region21
    $region20: #{tpu_custom_call.1} parent=1 // pred_region
      %88 = vsyncadd [#allocation4], 0
      %s90 = sshll.u32 [#allocation7], 4
      %s91 = int_to_ptr.vmem [resolvable:$true] %s90
      %s92 = sshll.u32 %s2, 4
      %s93 = int_to_ptr.hbm [resolvable:$true] %s92
      %95 = dma.vmem_to_hbm [thread:$0]  %s91, 128, %s93, [#allocation4]
    $region21: #{tpu_custom_call.1} parent=1 // pred_fallthru
      _
    // Predicated region
    $region22: #{tpu_custom_call.1} parent=1 // pred_check
      _
    $region23: #{tpu_custom_call.1} parent=1 // pred_check_branch
      %97 = sbr.rel (0) target = $region25
    $region24: #{tpu_custom_call.1} parent=1 // pred_region
      %99 = dma.done [#allocation4], 128
    $region25: #{tpu_custom_call.1} parent=1 // pred_fallthru
      _
    %100 = vsyncpa [#allocation3], 1
    %101 = vsyncpa [#allocation6], 1
    %102 = vsyncpa [#allocation4], 1

</llo_original>
